<compile_context>
chip_gen: v7x
topology: tpu7x:2x2x1
jax: 0.10.0
libtpu: 0.0.40
codegen_flags: <defaults>
</compile_context>

<pallas_src>
import functools

import jax
import jax.numpy as jnp
from jax.experimental import pallas as pl
from jax.experimental.pallas import tpu as pltpu


def _focal_loss_kernel(logits_ref, targets_ref, out_ref, acc_ref, *,
                       alpha, gamma, n_total, tile_n):
    i = pl.program_id(0)

    @pl.when(i == 0)
    def _init():
        acc_ref[...] = jnp.zeros_like(acc_ref)

    x = logits_ref[...].astype(jnp.float32)            # (tile_n, C) f32 compute
    t = targets_ref[...]                               # (tile_n, 1) int32 ids
    tn, c = x.shape

    # Valid-row mask for the (possibly ragged) last tile.
    row_ids = i * tile_n + jax.lax.broadcasted_iota(jnp.int32, (tn, 1), 0)
    valid = row_ids < n_total                          # (tile_n, 1) bool

    # Numerically stable log-sum-exp along the class (lane) axis.
    m = jnp.max(x, axis=1, keepdims=True)              # (tile_n, 1)
    shifted = x - m                                    # (tile_n, C)
    lse = jnp.log(jnp.sum(jnp.exp(shifted), axis=1, keepdims=True))

    # Fused target gather in the shifted domain:
    #   ce = lse - (x[t] - m)
    class_ids = jax.lax.broadcasted_iota(jnp.int32, (tn, c), 1)
    x_t_shifted = jnp.sum(jnp.where(class_ids == t, shifted, 0.0),
                          axis=1, keepdims=True)       # (tile_n, 1)
    ce = lse - x_t_shifted                             # per-sample cross-entropy

    pt = jnp.exp(-ce)
    one_minus_pt = 1.0 - pt
    g = float(gamma)
    if g == 2.0:
        focal_w = jnp.square(one_minus_pt)             # VPU, keeps EUP free
    elif g.is_integer() and 0.0 <= g <= 8.0:
        focal_w = jnp.ones_like(one_minus_pt)
        for _ in range(int(g)):
            focal_w = focal_w * one_minus_pt
    else:
        focal_w = one_minus_pt ** g                    # non-integer gamma: pow
    focal = focal_w * ce                               # alpha folded into final scale

    focal = jnp.where(valid, focal, 0.0)               # mask padded rows
    acc_ref[...] = acc_ref[...] + jnp.sum(focal)

    @pl.when(i == pl.num_programs(0) - 1)
    def _finalize():
        scale = jnp.float32(float(alpha) / float(n_total))
        out_ref[...] = acc_ref[...] * scale


def focal_loss(logits, targets, alpha=1.0, gamma=2.0, tile_n=None,
               vmem_limit_bytes=48 * 1024 * 1024):
    """logits: (N, C) float (f32 or bf16); targets: (N,) int class indices.

    Returns the scalar mean focal loss (float32).
    """
    n, c = logits.shape
    targets_2d = targets.astype(jnp.int32).reshape(n, 1)

    itemsize = jnp.dtype(logits.dtype).itemsize
    # Minimal sublane multiple for the input dtype (8 for f32, 16 for bf16, ...).
    min_rows = 8 if itemsize >= 4 else (32 // itemsize)

    if tile_n is None:
        # Per-buffer VMEM budget; Pallas double-buffers each input, so total
        # logits VMEM ~ 2 * budget, which fits v7x (64 MiB) and v5e/v6e.
        budget = 12 * 1024 * 1024
        rows = max(min_rows, budget // max(1, c * itemsize))
        tile_n = min(rows, 1024)
    tile_n = max(min_rows, (tile_n // min_rows) * min_rows)
    if tile_n >= n:
        tile_n = n  # single full-extent block (always a legal block shape)

    grid = (pl.cdiv(n, tile_n),)

    kernel = functools.partial(
        _focal_loss_kernel,
        alpha=float(alpha), gamma=float(gamma), n_total=n, tile_n=tile_n,
    )

    out = pl.pallas_call(
        kernel,
        out_shape=jax.ShapeDtypeStruct((1, 1), jnp.float32),
        grid_spec=pltpu.PrefetchScalarGridSpec(
            num_scalar_prefetch=0,
            grid=grid,
            in_specs=[
                pl.BlockSpec((tile_n, c), lambda i: (i, 0)),
                pl.BlockSpec((tile_n, 1), lambda i: (i, 0)),
            ],
            out_specs=pl.BlockSpec((1, 1), lambda i: (0, 0)),
            scratch_shapes=[pltpu.VMEM((1, 1), jnp.float32)],
        ),
        compiler_params=pltpu.CompilerParams(
            dimension_semantics=("arbitrary",),   # grid axis carries the accumulator
            vmem_limit_bytes=vmem_limit_bytes,
        ),
    )(logits, targets_2d)
    return out[0, 0]


def _focal_loss_ref(logits, targets, alpha=1.0, gamma=2.0):
    """Pure-JAX reference mirroring F.cross_entropy(reduction='none') + focal."""
    logp = jax.nn.log_softmax(logits.astype(jnp.float32), axis=-1)
    ce = -jnp.take_along_axis(logp, targets[:, None].astype(jnp.int32), axis=-1)[:, 0]
    pt = jnp.exp(-ce)
    return jnp.mean(alpha * (1.0 - pt) ** gamma * ce)


if __name__ == "__main__":
    key = jax.random.PRNGKey(0)
    k1, k2, k3, k4 = jax.random.split(key, 4)

    # Case 1: small f32 batch, single full-extent block.
    N, C = 8, 32
    logits = jax.random.normal(k1, (N, C), dtype=jnp.float32)
    targets = jax.random.randint(k2, (N,), 0, C, dtype=jnp.int32)
    loss = focal_loss(logits, targets, alpha=1.0, gamma=2.0)
    jax.block_until_ready(loss)
    ref = _focal_loss_ref(logits, targets, alpha=1.0, gamma=2.0)
    assert jnp.allclose(loss, ref, atol=1e-5, rtol=1e-5), (loss, ref)

    # Case 2: multi-tile grid with a ragged (masked) last tile + bf16 logits.
    N2, C2 = 50, 32
    logits2 = jax.random.normal(k3, (N2, C2), dtype=jnp.float32).astype(jnp.bfloat16)
    targets2 = jax.random.randint(k4, (N2,), 0, C2, dtype=jnp.int32)
    loss2 = focal_loss(logits2, targets2, alpha=1.0, gamma=2.0, tile_n=16)
    jax.block_until_ready(loss2)
    ref2 = _focal_loss_ref(logits2.astype(jnp.float32), targets2)
    assert jnp.allclose(loss2, ref2, atol=5e-2, rtol=5e-2), (loss2, ref2)

    print("KERNEL_OK")
</pallas_src>

<mosaic_0001>
module attributes {stable_mosaic.version = 11 : i64} {
  func.func @_focal_loss_kernel(%arg0: i32, %arg1: memref<8x32xf32, #tpu.memory_space<vmem>>, %arg2: memref<8x1xi32, #tpu.memory_space<vmem>>, %arg3: memref<1x1xf32, #tpu.memory_space<vmem>>, %arg4: memref<1x1xf32, #tpu.memory_space<vmem>>) attributes {dimension_semantics = [#tpu.dimension_semantics<arbitrary>], iteration_bounds = array<i64: 1>, scalar_prefetch = 0 : i64, scratch_operands = 1 : i64, tpu.core_type = #tpu.core_type<tc>, window_params = [{transform_indices = @transform_0, window_bounds = array<i64: 8, 32>}, {transform_indices = @transform_1, window_bounds = array<i64: 8, 1>}, {pipeline_mode = #tpu.pipeline_mode<synchronous>, transform_indices = @transform_2, window_bounds = array<i64: 1, 1>}]} {
    %c0_i32 = arith.constant 0 : i32
    %0 = arith.cmpi eq, %arg0, %c0_i32 : i32
    %1 = arith.extui %0 : i1 to i32
    %c0_i32_0 = arith.constant 0 : i32
    %2 = arith.cmpi ne, %1, %c0_i32_0 : i32
    scf.if %2 {
      %cst_18 = arith.constant 0.000000e+00 : f32
      %47 = vector.broadcast %cst_18 : f32 to vector<1x1xf32>
      %c0_19 = arith.constant 0 : index
      %c0_20 = arith.constant 0 : index
      %48 = vector.load %arg4[%c0_19, %c0_20] : memref<1x1xf32, #tpu.memory_space<vmem>>, vector<1x1xf32>
      tpu.vector_store %arg4[%c0_19, %c0_20], %47 {strides = array<i32>} : memref<1x1xf32, #tpu.memory_space<vmem>>, vector<1x1xf32>,
    } else {
    }
    %c0 = arith.constant 0 : index
    %c0_1 = arith.constant 0 : index
    %3 = vector.load %arg1[%c0, %c0_1] : memref<8x32xf32, #tpu.memory_space<vmem>>, vector<8x32xf32>
    %c0_2 = arith.constant 0 : index
    %c0_3 = arith.constant 0 : index
    %4 = vector.load %arg2[%c0_2, %c0_3] : memref<8x1xi32, #tpu.memory_space<vmem>>, vector<8x1xi32>
    %c8_i32 = arith.constant 8 : i32
    %5 = arith.muli %arg0, %c8_i32 : i32
    %6 = tpu.iota {dimensions = array<i32: 0>} : vector<8x1xi32>
    %7 = vector.broadcast %5 : i32 to vector<8x1xi32>
    %8 = arith.addi %7, %6 : vector<8x1xi32>
    %c8_i32_4 = arith.constant 8 : i32
    %9 = vector.broadcast %c8_i32_4 : i32 to vector<8x1xi32>
    %10 = arith.cmpi slt, %8, %9 : vector<8x1xi32>
    %cst = arith.constant dense<0xFF800000> : vector<8xf32>
    %11 = vector.multi_reduction <maximumf>, %3, %cst [1] : vector<8x32xf32> to vector<8xf32>
    %12 = vector.shape_cast %11 : vector<8xf32> to vector<8x1xf32>
    %13 = vector.broadcast %12 : vector<8x1xf32> to vector<8x32xf32>
    %14 = arith.subf %3, %13 : vector<8x32xf32>
    %15 = math.exp %14 : vector<8x32xf32>
    %cst_5 = arith.constant dense<0.000000e+00> : vector<8xf32>
    %16 = vector.multi_reduction <add>, %15, %cst_5 [1] : vector<8x32xf32> to vector<8xf32>
    %17 = vector.shape_cast %16 : vector<8xf32> to vector<8x1xf32>
    %18 = math.log %17 : vector<8x1xf32>
    %19 = tpu.iota {dimensions = array<i32: 1>} : vector<8x32xi32>
    %20 = vector.broadcast %4 : vector<8x1xi32> to vector<8x32xi32>
    %21 = arith.cmpi eq, %19, %20 : vector<8x32xi32>
    %cst_6 = arith.constant 0.000000e+00 : f32
    %22 = vector.broadcast %cst_6 : f32 to vector<8x32xf32>
    %23 = arith.select %21, %14, %22 : vector<8x32xi1>, vector<8x32xf32>
    %cst_7 = arith.constant dense<0.000000e+00> : vector<8xf32>
    %24 = vector.multi_reduction <add>, %23, %cst_7 [1] : vector<8x32xf32> to vector<8xf32>
    %25 = vector.shape_cast %24 : vector<8xf32> to vector<8x1xf32>
    %26 = arith.subf %18, %25 : vector<8x1xf32>
    %cst_8 = arith.constant 0.000000e+00 : f32
    %27 = vector.broadcast %cst_8 : f32 to vector<8x1xf32>
    %28 = arith.subf %27, %26 : vector<8x1xf32>
    %29 = math.exp %28 : vector<8x1xf32>
    %cst_9 = arith.constant 1.000000e+00 : f32
    %30 = vector.broadcast %cst_9 : f32 to vector<8x1xf32>
    %31 = arith.subf %30, %29 : vector<8x1xf32>
    %32 = arith.mulf %31, %31 : vector<8x1xf32>
    %33 = arith.mulf %32, %26 : vector<8x1xf32>
    %cst_10 = arith.constant 0.000000e+00 : f32
    %34 = vector.broadcast %cst_10 : f32 to vector<8x1xf32>
    %35 = arith.select %10, %33, %34 : vector<8x1xi1>, vector<8x1xf32>
    %c0_11 = arith.constant 0 : index
    %c0_12 = arith.constant 0 : index
    %36 = vector.load %arg4[%c0_11, %c0_12] : memref<1x1xf32, #tpu.memory_space<vmem>>, vector<1x1xf32>
    %37 = vector.shape_cast %35 : vector<8x1xf32> to vector<1x8x1xf32>
    %cst_13 = arith.constant dense<0.000000e+00> : vector<1xf32>
    %38 = vector.multi_reduction <add>, %37, %cst_13 [1, 2] : vector<1x8x1xf32> to vector<1xf32>
    %39 = vector.shape_cast %38 : vector<1xf32> to vector<1x1x1xf32>
    %40 = vector.extract %39[0, 0, 0] : f32 from vector<1x1x1xf32>
    %41 = vector.broadcast %40 : f32 to vector<1x1xf32>
    %42 = arith.addf %36, %41 : vector<1x1xf32>
    %c0_14 = arith.constant 0 : index
    %c0_15 = arith.constant 0 : index
    %43 = vector.load %arg4[%c0_14, %c0_15] : memref<1x1xf32, #tpu.memory_space<vmem>>, vector<1x1xf32>
    tpu.vector_store %arg4[%c0_14, %c0_15], %42 {strides = array<i32>} : memref<1x1xf32, #tpu.memory_space<vmem>>, vector<1x1xf32>,
    %c0_i32_16 = arith.constant 0 : i32
    %44 = arith.cmpi eq, %arg0, %c0_i32_16 : i32
    %45 = arith.extui %44 : i1 to i32
    %c0_i32_17 = arith.constant 0 : i32
    %46 = arith.cmpi ne, %45, %c0_i32_17 : i32
    scf.if %46 {
      %c0_18 = arith.constant 0 : index
      %c0_19 = arith.constant 0 : index
      %47 = vector.load %arg4[%c0_18, %c0_19] : memref<1x1xf32, #tpu.memory_space<vmem>>, vector<1x1xf32>
      %cst_20 = arith.constant 1.250000e-01 : f32
      %48 = vector.broadcast %cst_20 : f32 to vector<1x1xf32>
      %49 = arith.mulf %47, %48 : vector<1x1xf32>
      %c0_21 = arith.constant 0 : index
      %c0_22 = arith.constant 0 : index
      %50 = vector.load %arg3[%c0_21, %c0_22] : memref<1x1xf32, #tpu.memory_space<vmem>>, vector<1x1xf32>
      tpu.vector_store %arg3[%c0_21, %c0_22], %49 {strides = array<i32>} : memref<1x1xf32, #tpu.memory_space<vmem>>, vector<1x1xf32>,
    } else {
    }
    return
  }
  func.func @transform_0(%arg0: i32) -> (i32, i32) {
    %c0_i32 = arith.constant 0 : i32
    %c0_i32_0 = arith.constant 0 : i32
    return %arg0, %c0_i32 : i32, i32
  }
  func.func @transform_1(%arg0: i32) -> (i32, i32) {
    %c0_i32 = arith.constant 0 : i32
    %c0_i32_0 = arith.constant 0 : i32
    return %arg0, %c0_i32 : i32, i32
  }
  func.func @transform_2(%arg0: i32) -> (i32, i32) {
    %c0_i32 = arith.constant 0 : i32
    %c0_i32_0 = arith.constant 0 : i32
    %c0_i32_1 = arith.constant 0 : i32
    return %c0_i32, %c0_i32_0 : i32, i32
  }
}

</mosaic_0001>

<llo_original>
// kernel: tpu_custom_call.1
$region0: #{tpu_custom_call.1}
  #allocation0 [shape = 'u32[]', space=smem, size = 0x4, offset = 0x4, fixed_abs, tag = 'smem constant byte address 0x4 - core index']
  #allocation1 [shape = 'u32[144,128]{1,0:T(1,128)}', space=vmem, size = 0x12000, scoped, tag = 'internal scratch']
  #allocation2 [shape = 'f32[1,1]{1,0:T(1,128)}', space=vmem, size = 0x200, scoped, tag = 'scratch operand']
  %s0 = inlined_call_operand.vmem [shape: f32[8,32], index: 0, kind: input, shape index: {}]
  %s1 = inlined_call_operand.vmem [shape: s32[8,1], index: 1, kind: input, shape index: {}]
  %s2 = inlined_call_operand.hbm [shape: f32[1,1], index: 2, kind: output, shape index: {}]
  %s3 = sld [smem:[#allocation0]]
  $region26: #{tpu_custom_call.1} parent=0
    _
  %s5 = ssub.s32 1, %s3
  %s6 = scalar_select 0, %s5, %s3
  $region1: #{tpu_custom_call.1} parent=0
    #allocation3 [shape = 'u8[512]{0}', space=vmem, size = 0x400, scoped, tag = 'output window, operand 0, single buffered']
    #allocation4 [shape = 's32[1]{0}', space=sflag, size = 0x4, scoped, tag = 'scoped memory for tpu_custom_call.1']
    %7 = vsyncpa [#allocation4], 0
    // Predicated region
    $region2: #{tpu_custom_call.1} parent=1 // pred_check
      _
    $region3: #{tpu_custom_call.1} parent=1 // pred_check_branch
      %9 = sbr.rel (0) target = $region5
    $region4: #{tpu_custom_call.1} parent=1 // pred_region
      _
    $region5: #{tpu_custom_call.1} parent=1 // pred_fallthru
      _
    // Predicated region
    $region6: #{tpu_custom_call.1} parent=1 // pred_check
      _
    $region7: #{tpu_custom_call.1} parent=1 // pred_check_branch
      %11 = sbr.rel (0) target = $region9
    $region8: #{tpu_custom_call.1} parent=1 // pred_region
      _
    $region9: #{tpu_custom_call.1} parent=1 // pred_fallthru
      _
    %p12 = scmp.eq.s32.totalorder 0, 0
    // Predicated region
    $region10: #{tpu_custom_call.1} parent=1 // pred_check
      %p13 = pneg %p12
    $region11: #{tpu_custom_call.1} parent=1 // pred_check_branch
      %15 = sbr.rel (%p13) target = $region13
    $region12: #{tpu_custom_call.1} parent=1 // pred_region
      %vm16 = vcmask 0
      %17 = vst.msk [vmem:[#allocation2] sm:$0x1] %vm16, 0.0
    $region13: #{tpu_custom_call.1} parent=1 // pred_fallthru
      _
    %v18 = vld [vmem:[%s0] sm:$0xff]
    %v19 = vld [vmem:[%s1] sm:$0xff]
    %s20 = smul.u32 0, 8
    %v21 = vlaneseq
    %v22 = vshrl.u32 %v21, 7
    %v23 = vstv %s20
    %v24 = vadd.s32 %v23, %v22
    %vm25 = vcmp.lt.s32.totalorder %v24, 8
    %vm26 = vcmask 261120
    %v27 = vsel %vm26, %v18, -inf
    %28 = vmax.xlane.f32.xlu0 %v27
    %v29 = vpop.xlane.xlu0 %28
    %v30 = vsub.f32 %v18, %v29
    %v31 = vmul.f32 %v30, 1.442695
    %v32 = vpow.pop %v31
    %v33 = vsel %vm26, %v32, 0.0
    %34 = vadd.xlane.f32.xlu0 %v33
    %v35 = vpop.xlane.xlu0 %34
    %v36 = vlog2.pop %v35
    %v37 = vmul.f32 %v36, 0.6931472
    %v38 = vlaneseq
    %v39 = vand.u32 %v38, 127
    %40 = vset.pattern.permute.xlu0 0
    %41 = vperm.xlu0 %40, %v19
    %v42 = vpop.permute.xlu0 %41
    %vm43 = vcmp.eq.s32.totalorder %v39, %v42
    %v44 = vsel %vm43, %v30, 0.0
    %v45 = vsel %vm26, %v44, 0.0
    %46 = vadd.xlane.f32.xlu0 %v45
    %v47 = vpop.xlane.xlu0 %46
    %v48 = vsub.f32 %v37, %v47
    %v49 = vsub.f32 0.0, %v48
    %v50 = vmul.f32 %v49, 1.442695
    %v51 = vpow.pop %v50
    %v52 = vsub.f32 1.0, %v51
    %v53 = vmul.f32 %v52, %v52
    %v54 = vmul.f32 %v53, %v48
    %v55 = vsel %vm25, %v54, 0.0
    %v56 = vld [vmem:[#allocation2] sm:$0x1]
    %vm57 = vcmask 7168
    %v58 = vsel %vm57, %v55, 0.0
    %59 = vadd.xlane.f32.xlu0 %v58
    %v60 = vpop.xlane.xlu0 %59
    %v61 = vrot.slane %v60, 4
    %v62 = vadd.f32 %v60, %v61
    %v63 = vrot.slane %v62, 2
    %v64 = vadd.f32 %v62, %v63
    %v65 = vrot.slane %v64, 1
    %v66 = vadd.f32 %v64, %v65
    %s67 = vtos %v66
    %v68 = vstv %s67
    %v69 = vadd.f32 %v56, %v68
    %vm70 = vcmask 0
    %71 = vst.msk [vmem:[#allocation2] sm:$0x1] %vm70, %v69
    // Predicated region
    $region14: #{tpu_custom_call.1} parent=1 // pred_check
      %p72 = pneg %p12
    $region15: #{tpu_custom_call.1} parent=1 // pred_check_branch
      %74 = sbr.rel (%p72) target = $region17
    $region16: #{tpu_custom_call.1} parent=1 // pred_region
      %v75 = vld [vmem:[#allocation2] sm:$0x1]
      %v76 = vmul.f32 %v75, 0.125
      %77 = vst.msk [vmem:[#allocation3] sm:$0x1] %vm70, %v76
    $region17: #{tpu_custom_call.1} parent=1 // pred_fallthru
      _
    // Predicated region
    $region18: #{tpu_custom_call.1} parent=1 // pred_check
      _
    $region19: #{tpu_custom_call.1} parent=1 // pred_check_branch
      %79 = sbr.rel (0) target = $region21
    $region20: #{tpu_custom_call.1} parent=1 // pred_region
      %s81 = ssub.s32 16, 16
      %82 = vsyncadd [#allocation4], %s81
      %s84 = sshll.u32 [#allocation3], 4
      %s85 = int_to_ptr.vmem [resolvable:$true] %s84
      %87 = dma.vmem_to_hbm [thread:$0]  %s85, 16, %s2, [#allocation4]
    $region21: #{tpu_custom_call.1} parent=1 // pred_fallthru
      _
    // Predicated region
    $region22: #{tpu_custom_call.1} parent=1 // pred_check
      _
    $region23: #{tpu_custom_call.1} parent=1 // pred_check_branch
      %89 = sbr.rel (0) target = $region25
    $region24: #{tpu_custom_call.1} parent=1 // pred_region
      %90 = dma.done [#allocation4], 16
    $region25: #{tpu_custom_call.1} parent=1 // pred_fallthru
      _
    %91 = vsyncpa [#allocation4], 1

</llo_original>
